<compile_context>
chip_gen: v7x
topology: tpu7x:2x2x1
jax: 0.10.0
libtpu: 0.0.40
codegen_flags: <defaults>
</compile_context>

<pallas_src>
import numpy as np
import jax
import jax.numpy as jnp
from jax.experimental import pallas as pl
from jax.experimental.pallas import tpu as pltpu

N_QUBITS = 4
N_LAYERS = 2
POOL = 8
DIM = 2 ** N_QUBITS            # 16: pre_net width == amplitude-embedding dim
ROW = DIM * POOL * POOL        # 1024 input pixels feeding one group of 16 pooled values


# ----------------------------- Pallas kernel --------------------------------
def qnn_kernel(x_ref, w_ref, b1_ref, ut_ref, zw_ref, b2_ref, o_ref):
    # Fused AvgPool(8,8) + pre_net, then tanh:  (TM, 1024)bf16 @ (1024, 16)bf16 -> f32 acc.
    h = jnp.tanh(
        jnp.dot(x_ref[...], w_ref[...], preferred_element_type=jnp.float32)
        + b1_ref[...])
    # F.normalize(p=2, dim=1): max(||h||, 1e-12) == sqrt(max(||h||^2, 1e-24)); rsqrt on EUP.
    ss = jnp.sum(h * h, axis=-1, keepdims=True)
    hn = h * jax.lax.rsqrt(jnp.maximum(ss, 1e-24))
    # Quantum circuit: amplitude-embedded state evolved by the (real) circuit unitary.
    psi = jnp.dot(hn, ut_ref[...], preferred_element_type=jnp.float32)     # (TM, 16) f32
    probs = psi * psi
    # post_net with PauliZ readout folded in: logits = probs @ (Zsign @ W2^T) + b2.
    # Contract zw (1,16) with probs (TM,16) on the feature dim -> lane-dense (1, TM) row.
    logits = jax.lax.dot_general(
        zw_ref[...], probs,
        dimension_numbers=(((1,), (1,)), ((), ())),
        preferred_element_type=jnp.float32)
    o_ref[...] = logits + b2_ref[0, 0]


# ------------------------- circuit / constant setup --------------------------
def _ry(theta):
    c, s = np.cos(theta / 2.0), np.sin(theta / 2.0)
    return np.array([[c, -s], [s, c]], dtype=np.float64)


def _cnot(n, control, target):
    dim = 2 ** n
    U = np.zeros((dim, dim), dtype=np.float64)
    pc, pt = n - 1 - control, n - 1 - target
    for i in range(dim):
        j = i ^ (((i >> pc) & 1) << pt)
        U[j, i] = 1.0
    return U


def build_circuit_unitary(q_params, n_qubits, n_layers):
    thetas = np.asarray(q_params, dtype=np.float64).reshape(n_layers, n_qubits)
    dim = 2 ** n_qubits
    U_total = np.eye(dim)
    for l in range(n_layers):
        layer = np.array([[1.0]])
        for q in range(n_qubits):
            layer = np.kron(layer, _ry(thetas[l, q]))
        for q in range(n_qubits):
            layer = _cnot(n_qubits, q, (q + 1) % n_qubits) @ layer
        U_total = layer @ U_total
    return U_total                                    # (16, 16) real, float64


def build_zsign(n_qubits):
    dim = 2 ** n_qubits
    Z = np.zeros((dim, n_qubits), dtype=np.float64)
    for i in range(dim):
        for q in range(n_qubits):
            Z[i, q] = 1.0 - 2.0 * ((i >> (n_qubits - 1 - q)) & 1)
    return Z


def build_pool_matrix_natural(wp):
    """(1024, 16) matrix mapping 1024 NCHW-contiguous pixels (natural flat order, no host
    transpose) to their 16 AvgPool2d(8,8) outputs in torch's view(-1, 16) order."""
    w = wp * POOL
    strips = DIM // wp            # number of 8-image-row strips per group of 16 pooled values
    pm = np.zeros((ROW, DIM), dtype=np.float64)
    for g in range(strips):
        for r in range(POOL):
            for col in range(w):
                pm[g * POOL * w + r * w + col, g * wp + col // POOL] = 1.0 / (POOL * POOL)
    return pm


# ------------------------------- wrapper -------------------------------------
def _round_up(n, m):
    return ((n + m - 1) // m) * m


def _choose_tiling(b_eff, tm_max):
    """Pick (num_tiles, rows_per_tile) without padding the HBM-resident input."""
    if b_eff < 256:
        # Single block exactly covering the batch: no padding, no ragged boundary, and the
        # block dims equal the full array dims so the (8/16,128) tiling rule is trivially met.
        return 1, b_eff
    # Tile count first (>=2 grid steps so both v7x TensorCores get work), then a lane-dense
    # tile size; at most one ragged boundary tile, handled by Pallas (no jnp.pad HBM copy).
    tiles = max(2, pl.cdiv(b_eff, tm_max))
    tm_eff = _round_up(pl.cdiv(b_eff, tiles), 128)
    tiles = pl.cdiv(b_eff, tm_eff)
    return tiles, tm_eff


def qnn_forward(x, params, *, tm=4096, compute_dtype=jnp.bfloat16):
    B, C, H, W = x.shape
    assert H % POOL == 0 and W % POOL == 0
    Hp, Wp = H // POOL, W // POOL
    assert (B * C * Hp * Wp) % DIM == 0, "pooled element count must be a multiple of 16"
    assert DIM % Wp == 0, "natural-layout pooling requires (W // 8) to divide 16"
    assert Wp == params["wp"], "params were built for a different image width"

    # Pure reshape (view, no transpose/HBM copy): each row holds the 1024 NCHW-contiguous
    # pixels feeding one group of 16 pooled values.
    x2d = x.reshape(-1, ROW)
    if x2d.dtype != compute_dtype:
        # NOTE: ideally x already lives in HBM as `compute_dtype` (or the cast is fused by
        # XLA into the producer) so this conversion is not a separate HBM pass.
        x2d = x2d.astype(compute_dtype)
    b_eff = x2d.shape[0]

    if compute_dtype == jnp.float32:
        tm = min(tm, 2048)   # keep the streamed x buffer <= 8 MiB for v7x's 64 MiB VMEM
    tiles, tm_eff = _choose_tiling(b_eff, tm)
    b_out = tiles * tm_eff   # output is padded (it's tiny); the input is NOT padded

    itemsize = jnp.dtype(compute_dtype).itemsize
    tile_bytes = tm_eff * ROW * itemsize
    vmem_limit = min(max(2 * tile_bytes + (16 << 20), 32 << 20), 100 << 20)

    w_fused = params["w_fused"].astype(compute_dtype)   # 64 KiB constant

    cost = pl.CostEstimate(
        flops=int(b_out) * 2 * (ROW * DIM + DIM * DIM + DIM),
        transcendentals=int(b_out) * (DIM + 1),
        bytes_accessed=int(b_eff) * ROW * itemsize + int(b_out) * 4
                       + ROW * DIM * itemsize + (3 * DIM + 1) * 4,
    )

    out = pl.pallas_call(
        qnn_kernel,
        out_shape=jax.ShapeDtypeStruct((1, b_out), jnp.float32),
        grid=(tiles,),
        in_specs=[
            pl.BlockSpec((tm_eff, ROW), lambda i: (i, 0)),        # streamed batch tile (bf16)
            pl.BlockSpec((ROW, DIM), lambda i: (0, 0)),           # fused pool + pre_net W
            pl.BlockSpec((1, DIM), lambda i: (0, 0)),             # b1 (f32)
            pl.BlockSpec((DIM, DIM), lambda i: (0, 0)),           # circuit unitary^T (f32)
            pl.BlockSpec((1, DIM), lambda i: (0, 0)),             # Zsign @ W2^T row (f32)
            pl.BlockSpec(memory_space=pltpu.MemorySpace.SMEM),    # b2 scalar
        ],
        out_specs=pl.BlockSpec((1, tm_eff), lambda i: (0, i)),    # lane-dense logits row
        compiler_params=pltpu.CompilerParams(
            dimension_semantics=("parallel",),
            vmem_limit_bytes=int(vmem_limit),
        ),
        cost_estimate=cost,
    )(x2d, w_fused, params["b1"], params["ut"], params["zw"], params["b2"])

    return out.reshape(-1)[:b_eff].reshape(b_eff, 1)


def init_params(key, img_w=16):
    assert img_w % POOL == 0
    wp = img_w // POOL
    assert DIM % wp == 0
    k1, k2, k3, k4, k5 = jax.random.split(key, 5)
    # pre_net: Linear(16, 16)
    w1 = jax.random.uniform(k1, (DIM, DIM), jnp.float32, -0.25, 0.25)
    b1 = jax.random.uniform(k2, (1, DIM), jnp.float32, -0.25, 0.25)
    # q_params ~ Normal(0, pi), shape (n_layers * n_qubits,)
    q_params = np.pi * jax.random.normal(k3, (N_LAYERS * N_QUBITS,), jnp.float32)
    # post_net: Linear(n_qubits, 1)
    w2 = jax.random.uniform(k4, (1, N_QUBITS), jnp.float32, -0.5, 0.5)
    b2 = jax.random.uniform(k5, (1, 1), jnp.float32, -0.5, 0.5)

    # Host-side constant folding in float64, cast once to f32:
    pm = build_pool_matrix_natural(wp)                                        # (1024, 16)
    w_fused = pm @ np.asarray(jax.device_get(w1), np.float64).T               # (1024, 16)
    u_total = build_circuit_unitary(jax.device_get(q_params), N_QUBITS, N_LAYERS)
    zsign = build_zsign(N_QUBITS)                                             # (16, 4)
    zw = (zsign @ np.asarray(jax.device_get(w2), np.float64).T).T             # (1, 16)

    params = {
        "wp": wp,
        "w_fused": jnp.asarray(w_fused, jnp.float32),   # pooling folded into pre_net weight
        "b1": jnp.asarray(b1),
        "ut": jnp.asarray(u_total.T, jnp.float32),      # kernel does hn @ U^T
        "zw": jnp.asarray(zw, jnp.float32),             # Zsign @ W2^T, as a (1, 16) row
        "b2": jnp.asarray(b2),                          # (1, 1) scalar, lives in SMEM
    }
    ref = {  # raw pieces for an op-for-op f32 reference check
        "w1": jnp.asarray(w1), "b1": jnp.asarray(b1),
        "u": jnp.asarray(u_total, jnp.float32),
        "zsign": jnp.asarray(zsign, jnp.float32),
        "w2": jnp.asarray(w2), "b2": jnp.asarray(b2),
    }
    return params, ref


if __name__ == "__main__":
    key = jax.random.PRNGKey(0)
    pkey, xkey = jax.random.split(key)

    # NCHW input, small shapes consistent with the module: 16/8 spatial pooling,
    # C*Hp*Wp = 4*2*2 = 16 pooled values per batch element -> view(-1, 16) gives B_eff = 2.
    x = jax.random.normal(xkey, (2, 4, 16, 16), jnp.float32)
    params, ref = init_params(pkey, img_w=x.shape[-1])

    logits = qnn_forward(x, params)
    logits = jax.block_until_ready(logits)

    # Pure-JAX f32 reference following the PyTorch module op-for-op (loose tolerance since
    # the kernel streams x / w_fused in bf16 with f32 accumulation).
    B, C, H, W = x.shape
    pooled = x.reshape(B, C, H // POOL, POOL, W // POOL, POOL).mean(axis=(3, 5))
    feats = pooled.reshape(-1, DIM)
    h = jnp.tanh(feats @ ref["w1"].T + ref["b1"])
    hn = h / jnp.maximum(jnp.linalg.norm(h, axis=1, keepdims=True), 1e-12)
    psi = hn @ ref["u"].T
    expz = (psi * psi) @ ref["zsign"]
    logits_ref = expz @ ref["w2"].T + ref["b2"]

    assert logits.shape == (feats.shape[0], 1)
    assert bool(jnp.all(jnp.isfinite(logits)))
    assert bool(jnp.allclose(logits, logits_ref, atol=5e-2, rtol=0.0))
    print("KERNEL_OK")
</pallas_src>

<mosaic_0001>
module attributes {stable_mosaic.version = 11 : i64} {
  func.func @qnn_kernel(%arg0: i32, %arg1: memref<2x1024xbf16, #tpu.memory_space<vmem>>, %arg2: memref<1024x16xbf16, #tpu.memory_space<vmem>>, %arg3: memref<1x16xf32, #tpu.memory_space<vmem>>, %arg4: memref<16x16xf32, #tpu.memory_space<vmem>>, %arg5: memref<1x16xf32, #tpu.memory_space<vmem>>, %arg6: memref<1x1xf32, #tpu.memory_space<smem>>, %arg7: memref<1x2xf32, #tpu.memory_space<vmem>>) attributes {dimension_semantics = [#tpu.dimension_semantics<parallel>], iteration_bounds = array<i64: 1>, scalar_prefetch = 0 : i64, scratch_operands = 0 : i64, tpu.core_type = #tpu.core_type<tc>, window_params = [{transform_indices = @transform_0, window_bounds = array<i64: 2, 1024>}, {pipeline_mode = #tpu.pipeline_mode<synchronous>, transform_indices = @transform_1, window_bounds = array<i64: 1024, 16>}, {pipeline_mode = #tpu.pipeline_mode<synchronous>, transform_indices = @transform_2, window_bounds = array<i64: 1, 16>}, {pipeline_mode = #tpu.pipeline_mode<synchronous>, transform_indices = @transform_3, window_bounds = array<i64: 16, 16>}, {pipeline_mode = #tpu.pipeline_mode<synchronous>, transform_indices = @transform_4, window_bounds = array<i64: 1, 16>}, {transform_indices = @transform_5, window_bounds = array<i64: 1, 1>}, {transform_indices = @transform_6, window_bounds = array<i64: 1, 2>}]} {
    %c0 = arith.constant 0 : index
    %c0_0 = arith.constant 0 : index
    %0 = vector.load %arg1[%c0, %c0_0] : memref<2x1024xbf16, #tpu.memory_space<vmem>>, vector<2x1024xbf16>
    %c0_1 = arith.constant 0 : index
    %c0_2 = arith.constant 0 : index
    %1 = vector.load %arg2[%c0_1, %c0_2] : memref<1024x16xbf16, #tpu.memory_space<vmem>>, vector<1024x16xbf16>
    %cst = arith.constant dense<0.000000e+00> : vector<2x16xf32>
    %2 = tpu.matmul %0, %1, %cst {dimension_numbers = #tpu.dot_dimension_numbers<[1], [0], [0], [1], [0, 0, 1, 1], [], []>} : vector<2x1024xbf16>, vector<1024x16xbf16>, vector<2x16xf32> -> vector<2x16xf32>
    %c0_3 = arith.constant 0 : index
    %c0_4 = arith.constant 0 : index
    %3 = vector.load %arg3[%c0_3, %c0_4] : memref<1x16xf32, #tpu.memory_space<vmem>>, vector<1x16xf32>
    %4 = vector.broadcast %3 : vector<1x16xf32> to vector<2x16xf32>
    %5 = arith.addf %2, %4 : vector<2x16xf32>
    %6 = math.tanh %5 : vector<2x16xf32>
    %7 = arith.mulf %6, %6 : vector<2x16xf32>
    %cst_5 = arith.constant dense<0.000000e+00> : vector<2xf32>
    %8 = vector.multi_reduction <add>, %7, %cst_5 [1] : vector<2x16xf32> to vector<2xf32>
    %9 = vector.shape_cast %8 : vector<2xf32> to vector<2x1xf32>
    %cst_6 = arith.constant 1.000000e-24 : f32
    %10 = vector.broadcast %cst_6 : f32 to vector<2x1xf32>
    %11 = arith.maximumf %9, %10 : vector<2x1xf32>
    %12 = math.rsqrt %11 : vector<2x1xf32>
    %13 = vector.broadcast %12 : vector<2x1xf32> to vector<2x16xf32>
    %14 = arith.mulf %6, %13 : vector<2x16xf32>
    %c0_7 = arith.constant 0 : index
    %c0_8 = arith.constant 0 : index
    %15 = vector.load %arg4[%c0_7, %c0_8] : memref<16x16xf32, #tpu.memory_space<vmem>>, vector<16x16xf32>
    %cst_9 = arith.constant dense<0.000000e+00> : vector<2x16xf32>
    %16 = tpu.matmul %14, %15, %cst_9 {dimension_numbers = #tpu.dot_dimension_numbers<[1], [0], [0], [1], [0, 0, 1, 1], [], []>} : vector<2x16xf32>, vector<16x16xf32>, vector<2x16xf32> -> vector<2x16xf32>
    %17 = arith.mulf %16, %16 : vector<2x16xf32>
    %c0_10 = arith.constant 0 : index
    %c0_11 = arith.constant 0 : index
    %18 = vector.load %arg5[%c0_10, %c0_11] : memref<1x16xf32, #tpu.memory_space<vmem>>, vector<1x16xf32>
    %cst_12 = arith.constant dense<0.000000e+00> : vector<1x2xf32>
    %19 = tpu.matmul %18, %17, %cst_12 {dimension_numbers = #tpu.dot_dimension_numbers<[1], [1], [0], [0], [0, 0, 1, 0], [], []>} : vector<1x16xf32>, vector<2x16xf32>, vector<1x2xf32> -> vector<1x2xf32>
    %c0_13 = arith.constant 0 : index
    %c0_14 = arith.constant 0 : index
    %20 = memref.load %arg6[%c0_13, %c0_14] : memref<1x1xf32, #tpu.memory_space<smem>>
    %21 = vector.broadcast %20 : f32 to vector<1x2xf32>
    %22 = arith.addf %19, %21 : vector<1x2xf32>
    %c0_15 = arith.constant 0 : index
    %c0_16 = arith.constant 0 : index
    %23 = vector.load %arg7[%c0_15, %c0_16] : memref<1x2xf32, #tpu.memory_space<vmem>>, vector<1x2xf32>
    tpu.vector_store %arg7[%c0_15, %c0_16], %22 {strides = array<i32>} : memref<1x2xf32, #tpu.memory_space<vmem>>, vector<1x2xf32>,
    return
  }
  func.func @transform_0(%arg0: i32) -> (i32, i32) {
    %c0_i32 = arith.constant 0 : i32
    %c0_i32_0 = arith.constant 0 : i32
    return %arg0, %c0_i32 : i32, i32
  }
  func.func @transform_1(%arg0: i32) -> (i32, i32) {
    %c0_i32 = arith.constant 0 : i32
    %c0_i32_0 = arith.constant 0 : i32
    %c0_i32_1 = arith.constant 0 : i32
    return %c0_i32, %c0_i32_0 : i32, i32
  }
  func.func @transform_2(%arg0: i32) -> (i32, i32) {
    %c0_i32 = arith.constant 0 : i32
    %c0_i32_0 = arith.constant 0 : i32
    %c0_i32_1 = arith.constant 0 : i32
    return %c0_i32, %c0_i32_0 : i32, i32
  }
  func.func @transform_3(%arg0: i32) -> (i32, i32) {
    %c0_i32 = arith.constant 0 : i32
    %c0_i32_0 = arith.constant 0 : i32
    %c0_i32_1 = arith.constant 0 : i32
    return %c0_i32, %c0_i32_0 : i32, i32
  }
  func.func @transform_4(%arg0: i32) -> (i32, i32) {
    %c0_i32 = arith.constant 0 : i32
    %c0_i32_0 = arith.constant 0 : i32
    %c0_i32_1 = arith.constant 0 : i32
    return %c0_i32, %c0_i32_0 : i32, i32
  }
  func.func @transform_5(%arg0: i32) -> (i32, i32) {
    %c0_i32 = arith.constant 0 : i32
    %c0_i32_0 = arith.constant 0 : i32
    %c0_i32_1 = arith.constant 0 : i32
    return %c0_i32, %c0_i32_0 : i32, i32
  }
  func.func @transform_6(%arg0: i32) -> (i32, i32) {
    %c0_i32 = arith.constant 0 : i32
    %c0_i32_0 = arith.constant 0 : i32
    return %c0_i32, %arg0 : i32, i32
  }
}

</mosaic_0001>

<llo_original>
// kernel: tpu_custom_call.1
$region0: #{tpu_custom_call.1}
  #allocation0 [shape = 'u32[]', space=smem, size = 0x4, offset = 0x4, fixed_abs, tag = 'smem constant byte address 0x4 - core index']
  #allocation1 [shape = 'u32[144,128]{1,0:T(1,128)}', space=vmem, size = 0x12000, scoped, tag = 'internal scratch']
  #allocation2 [shape = 'f32[1,1]{1,0:T(1,128)S(6)}', space=smem, size = 0x200, scoped, tag = 'scoped memory for tpu_custom_call.1']
  %s0 = inlined_call_operand.vmem [shape: bf16[2,1024], index: 0, kind: input, shape index: {}]
  %s1 = inlined_call_operand.vmem [shape: bf16[1024,16], index: 1, kind: input, shape index: {}]
  %s2 = inlined_call_operand.vmem [shape: f32[1,16], index: 2, kind: input, shape index: {}]
  %s3 = inlined_call_operand.vmem [shape: f32[16,16], index: 3, kind: input, shape index: {}]
  %s4 = inlined_call_operand.vmem [shape: f32[1,16], index: 4, kind: input, shape index: {}]
  %s5 = inlined_call_operand.<no memory space> [shape: f32[1,1], index: 5, kind: input, shape index: {}]
  %s6 = inlined_call_operand.hbm [shape: f32[1,2], index: 6, kind: output, shape index: {}]
  %s7 = sld [smem:[#allocation0]]
  $region34: #{tpu_custom_call.1} parent=0
    _
  %s9 = ssub.s32 1, %s7
  %s10 = scalar_select 0, %s9, %s7
  %11 = sst [smem:[#allocation2]] %s5
  $region1: #{tpu_custom_call.1} parent=0
    #allocation3 [shape = 'u8[512]{0}', space=vmem, size = 0x400, scoped, tag = 'output window, operand 0, single buffered']
    #allocation4 [shape = 's32[1]{0}', space=sflag, size = 0x4, scoped, tag = 'scoped memory for tpu_custom_call.1']
    %12 = vsyncpa [#allocation4], 0
    // Predicated region
    $region2: #{tpu_custom_call.1} parent=1 // pred_check
      _
    $region3: #{tpu_custom_call.1} parent=1 // pred_check_branch
      %14 = sbr.rel (0) target = $region5
    $region4: #{tpu_custom_call.1} parent=1 // pred_region
      _
    $region5: #{tpu_custom_call.1} parent=1 // pred_fallthru
      _
    // Predicated region
    $region6: #{tpu_custom_call.1} parent=1 // pred_check
      _
    $region7: #{tpu_custom_call.1} parent=1 // pred_check_branch
      %16 = sbr.rel (0) target = $region9
    $region8: #{tpu_custom_call.1} parent=1 // pred_region
      _
    $region9: #{tpu_custom_call.1} parent=1 // pred_fallthru
      _
    // Predicated region
    $region10: #{tpu_custom_call.1} parent=1 // pred_check
      _
    $region11: #{tpu_custom_call.1} parent=1 // pred_check_branch
      %18 = sbr.rel (0) target = $region13
    $region12: #{tpu_custom_call.1} parent=1 // pred_region
      _
    $region13: #{tpu_custom_call.1} parent=1 // pred_fallthru
      _
    // Predicated region
    $region14: #{tpu_custom_call.1} parent=1 // pred_check
      _
    $region15: #{tpu_custom_call.1} parent=1 // pred_check_branch
      %20 = sbr.rel (0) target = $region17
    $region16: #{tpu_custom_call.1} parent=1 // pred_region
      _
    $region17: #{tpu_custom_call.1} parent=1 // pred_fallthru
      _
    // Predicated region
    $region18: #{tpu_custom_call.1} parent=1 // pred_check
      _
    $region19: #{tpu_custom_call.1} parent=1 // pred_check_branch
      %22 = sbr.rel (0) target = $region21
    $region20: #{tpu_custom_call.1} parent=1 // pred_region
      _
    $region21: #{tpu_custom_call.1} parent=1 // pred_fallthru
      _
    // Predicated region
    $region22: #{tpu_custom_call.1} parent=1 // pred_check
      _
    $region23: #{tpu_custom_call.1} parent=1 // pred_check_branch
      %24 = sbr.rel (0) target = $region25
    $region24: #{tpu_custom_call.1} parent=1 // pred_region
      _
    $region25: #{tpu_custom_call.1} parent=1 // pred_fallthru
      _
    %v26 = vld [vmem:[%s0] sm:$0xff]
    %v27 = vld [vmem:[%s1] sm:$0xf]
    %v28 = vld [vmem:[%s1 + $0x4] sm:$0xf]
    %v29 = vld [vmem:[%s1 + $0x8] sm:$0xf]
    %v30 = vld [vmem:[%s1 + $0xc] sm:$0xf]
    %v31 = vld [vmem:[%s1 + $0x10] sm:$0xf]
    %v32 = vld [vmem:[%s1 + $0x14] sm:$0xf]
    %v33 = vld [vmem:[%s1 + $0x18] sm:$0xf]
    %v34 = vld [vmem:[%s1 + $0x1c] sm:$0xf]
    %v35 = vld [vmem:[%s1 + $0x20] sm:$0xf]
    %v36 = vld [vmem:[%s1 + $0x24] sm:$0xf]
    %v37 = vld [vmem:[%s1 + $0x28] sm:$0xf]
    %v38 = vld [vmem:[%s1 + $0x2c] sm:$0xf]
    %v39 = vld [vmem:[%s1 + $0x30] sm:$0xf]
    %v40 = vld [vmem:[%s1 + $0x34] sm:$0xf]
    %v41 = vld [vmem:[%s1 + $0x38] sm:$0xf]
    %v42 = vld [vmem:[%s1 + $0x3c] sm:$0xf]
    %v43 = vld [vmem:[%s1 + $0x40] sm:$0xf]
    %v44 = vld [vmem:[%s1 + $0x44] sm:$0xf]
    %v45 = vld [vmem:[%s1 + $0x48] sm:$0xf]
    %v46 = vld [vmem:[%s1 + $0x4c] sm:$0xf]
    %v47 = vld [vmem:[%s1 + $0x50] sm:$0xf]
    %v48 = vld [vmem:[%s1 + $0x54] sm:$0xf]
    %v49 = vld [vmem:[%s1 + $0x58] sm:$0xf]
    %v50 = vld [vmem:[%s1 + $0x5c] sm:$0xf]
    %v51 = vld [vmem:[%s1 + $0x60] sm:$0xf]
    %v52 = vld [vmem:[%s1 + $0x64] sm:$0xf]
    %v53 = vld [vmem:[%s1 + $0x68] sm:$0xf]
    %v54 = vld [vmem:[%s1 + $0x6c] sm:$0xf]
    %v55 = vld [vmem:[%s1 + $0x70] sm:$0xf]
    %v56 = vld [vmem:[%s1 + $0x74] sm:$0xf]
    %v57 = vld [vmem:[%s1 + $0x78] sm:$0xf]
    %v58 = vld [vmem:[%s1 + $0x7c] sm:$0xf]
    %v59 = vld [vmem:[%s1 + $0x80] sm:$0xf]
    %v60 = vld [vmem:[%s1 + $0x84] sm:$0xf]
    %v61 = vld [vmem:[%s1 + $0x88] sm:$0xf]
    %v62 = vld [vmem:[%s1 + $0x8c] sm:$0xf]
    %v63 = vld [vmem:[%s1 + $0x90] sm:$0xf]
    %v64 = vld [vmem:[%s1 + $0x94] sm:$0xf]
    %v65 = vld [vmem:[%s1 + $0x98] sm:$0xf]
    %v66 = vld [vmem:[%s1 + $0x9c] sm:$0xf]
    %v67 = vld [vmem:[%s1 + $0xa0] sm:$0xf]
    %v68 = vld [vmem:[%s1 + $0xa4] sm:$0xf]
    %v69 = vld [vmem:[%s1 + $0xa8] sm:$0xf]
    %v70 = vld [vmem:[%s1 + $0xac] sm:$0xf]
    %v71 = vld [vmem:[%s1 + $0xb0] sm:$0xf]
    %v72 = vld [vmem:[%s1 + $0xb4] sm:$0xf]
    %v73 = vld [vmem:[%s1 + $0xb8] sm:$0xf]
    %v74 = vld [vmem:[%s1 + $0xbc] sm:$0xf]
    %v75 = vld [vmem:[%s1 + $0xc0] sm:$0xf]
    %v76 = vld [vmem:[%s1 + $0xc4] sm:$0xf]
    %v77 = vld [vmem:[%s1 + $0xc8] sm:$0xf]
    %v78 = vld [vmem:[%s1 + $0xcc] sm:$0xf]
    %v79 = vld [vmem:[%s1 + $0xd0] sm:$0xf]
    %v80 = vld [vmem:[%s1 + $0xd4] sm:$0xf]
    %v81 = vld [vmem:[%s1 + $0xd8] sm:$0xf]
    %v82 = vld [vmem:[%s1 + $0xdc] sm:$0xf]
    %v83 = vld [vmem:[%s1 + $0xe0] sm:$0xf]
    %v84 = vld [vmem:[%s1 + $0xe4] sm:$0xf]
    %v85 = vld [vmem:[%s1 + $0xe8] sm:$0xf]
    %v86 = vld [vmem:[%s1 + $0xec] sm:$0xf]
    %v87 = vld [vmem:[%s1 + $0xf0] sm:$0xf]
    %v88 = vld [vmem:[%s1 + $0xf4] sm:$0xf]
    %v89 = vld [vmem:[%s1 + $0xf8] sm:$0xf]
    %v90 = vld [vmem:[%s1 + $0xfc] sm:$0xf]
    %v91 = vld [vmem:[%s1 + $0x100] sm:$0xf]
    %v92 = vld [vmem:[%s1 + $0x104] sm:$0xf]
    %v93 = vld [vmem:[%s1 + $0x108] sm:$0xf]
    %v94 = vld [vmem:[%s1 + $0x10c] sm:$0xf]
    %v95 = vld [vmem:[%s1 + $0x110] sm:$0xf]
    %v96 = vld [vmem:[%s1 + $0x114] sm:$0xf]
    %v97 = vld [vmem:[%s1 + $0x118] sm:$0xf]
    %v98 = vld [vmem:[%s1 + $0x11c] sm:$0xf]
    %v99 = vld [vmem:[%s1 + $0x120] sm:$0xf]
    %v100 = vld [vmem:[%s1 + $0x124] sm:$0xf]
    %v101 = vld [vmem:[%s1 + $0x128] sm:$0xf]
    %v102 = vld [vmem:[%s1 + $0x12c] sm:$0xf]
    %v103 = vld [vmem:[%s1 + $0x130] sm:$0xf]
    %v104 = vld [vmem:[%s1 + $0x134] sm:$0xf]
    %v105 = vld [vmem:[%s1 + $0x138] sm:$0xf]
    %v106 = vld [vmem:[%s1 + $0x13c] sm:$0xf]
    %v107 = vld [vmem:[%s1 + $0x140] sm:$0xf]
    %v108 = vld [vmem:[%s1 + $0x144] sm:$0xf]
    %v109 = vld [vmem:[%s1 + $0x148] sm:$0xf]
    %v110 = vld [vmem:[%s1 + $0x14c] sm:$0xf]
    %v111 = vld [vmem:[%s1 + $0x150] sm:$0xf]
    %v112 = vld [vmem:[%s1 + $0x154] sm:$0xf]
    %v113 = vld [vmem:[%s1 + $0x158] sm:$0xf]
    %v114 = vld [vmem:[%s1 + $0x15c] sm:$0xf]
    %v115 = vld [vmem:[%s1 + $0x160] sm:$0xf]
    %v116 = vld [vmem:[%s1 + $0x164] sm:$0xf]
    %v117 = vld [vmem:[%s1 + $0x168] sm:$0xf]
    %v118 = vld [vmem:[%s1 + $0x16c] sm:$0xf]
    %v119 = vld [vmem:[%s1 + $0x170] sm:$0xf]
    %v120 = vld [vmem:[%s1 + $0x174] sm:$0xf]
    %v121 = vld [vmem:[%s1 + $0x178] sm:$0xf]
    %v122 = vld [vmem:[%s1 + $0x17c] sm:$0xf]
    %v123 = vld [vmem:[%s1 + $0x180] sm:$0xf]
    %v124 = vld [vmem:[%s1 + $0x184] sm:$0xf]
    %v125 = vld [vmem:[%s1 + $0x188] sm:$0xf]
    %v126 = vld [vmem:[%s1 + $0x18c] sm:$0xf]
    %v127 = vld [vmem:[%s1 + $0x190] sm:$0xf]
    %v128 = vld [vmem:[%s1 + $0x194] sm:$0xf]
    %v129 = vld [vmem:[%s1 + $0x198] sm:$0xf]
    %v130 = vld [vmem:[%s1 + $0x19c] sm:$0xf]
    %v131 = vld [vmem:[%s1 + $0x1a0] sm:$0xf]
    %v132 = vld [vmem:[%s1 + $0x1a4] sm:$0xf]
    %v133 = vld [vmem:[%s1 + $0x1a8] sm:$0xf]
    %v134 = vld [vmem:[%s1 + $0x1ac] sm:$0xf]
    %v135 = vld [vmem:[%s1 + $0x1b0] sm:$0xf]
    %v136 = vld [vmem:[%s1 + $0x1b4] sm:$0xf]
    %v137 = vld [vmem:[%s1 + $0x1b8] sm:$0xf]
    %v138 = vld [vmem:[%s1 + $0x1bc] sm:$0xf]
    %v139 = vld [vmem:[%s1 + $0x1c0] sm:$0xf]
    %v140 = vld [vmem:[%s1 + $0x1c4] sm:$0xf]
    %v141 = vld [vmem:[%s1 + $0x1c8] sm:$0xf]
    %v142 = vld [vmem:[%s1 + $0x1cc] sm:$0xf]
    %v143 = vld [vmem:[%s1 + $0x1d0] sm:$0xf]
    %v144 = vld [vmem:[%s1 + $0x1d4] sm:$0xf]
    %v145 = vld [vmem:[%s1 + $0x1d8] sm:$0xf]
    %v146 = vld [vmem:[%s1 + $0x1dc] sm:$0xf]
    %v147 = vld [vmem:[%s1 + $0x1e0] sm:$0xf]
    %v148 = vld [vmem:[%s1 + $0x1e4] sm:$0xf]
    %v149 = vld [vmem:[%s1 + $0x1e8] sm:$0xf]
    %v150 = vld [vmem:[%s1 + $0x1ec] sm:$0xf]
    %v151 = vld [vmem:[%s1 + $0x1f0] sm:$0xf]
    %v152 = vld [vmem:[%s1 + $0x1f4] sm:$0xf]
    %v153 = vld [vmem:[%s1 + $0x1f8] sm:$0xf]
    %v154 = vld [vmem:[%s1 + $0x1fc] sm:$0xf]
    %v155 = vld [vmem:[%s2] sm:$0x1]
    %v157 = vlaneseq
    %v158 = vshrl.u32 %v157, 7
    %v159 = vsub.s32 0, %v158
    %v160 = vrot.slane %v155, %v159
    %v163 = vcombine.high %v26, %v26
    %v165 = vunpack.c.l.s4 1966171168
    %v166 = vunpack.c.0.s8 %v165
    %v167 = vlaneseq
    %v168 = vshrl.u32 %v167, 7
    %v169 = vsub.s32 %v166, %v168
    %v170 = vrot.slane %v26, %v169
    %v172 = vunpack.c.l.s4 1966171168
    %v173 = vunpack.c.0.s8 %v172
    %v174 = vlaneseq
    %v175 = vshrl.u32 %v174, 7
    %v176 = vsub.s32 %v173, %v175
    %v177 = vrot.slane %v163, %v176
    %v178 = vcombine.high %v170, %v170
    %v179 = vcombine.high %v177, %v177
    %v181 = vunpack.c.l.s4 1966171168
    %v182 = vunpack.c.0.s8 %v181
    %v183 = vlaneseq
    %v184 = vshrl.u32 %v183, 7
    %v185 = vsub.s32 %v182, %v184
    %v186 = vrot.slane %v170, %v185
    %v188 = vunpack.c.l.s4 1966171168
    %v189 = vunpack.c.0.s8 %v188
    %v190 = vlaneseq
    %v191 = vshrl.u32 %v190, 7
    %v192 = vsub.s32 %v189, %v191
    %v193 = vrot.slane %v177, %v192
    %v195 = vunpack.c.l.s4 1966171168
    %v196 = vunpack.c.0.s8 %v195
    %v197 = vlaneseq
    %v198 = vshrl.u32 %v197, 7
    %v199 = vsub.s32 %v196, %v198
    %v200 = vrot.slane %v178, %v199
    %v202 = vunpack.c.l.s4 1966171168
    %v203 = vunpack.c.0.s8 %v202
    %v204 = vlaneseq
    %v205 = vshrl.u32 %v204, 7
    %v206 = vsub.s32 %v203, %v205
    %v207 = vrot.slane %v179, %v206
    %v208 = vcombine.high %v186, %v186
    %v209 = vcombine.high %v193, %v193
    %v210 = vcombine.high %v200, %v200
    %v211 = vcombine.high %v207, %v207
    %v348 = vunpack.c.l.b16 %v27
    %v349 = vunpack.c.l.b16 %v28
    %v350 = vunpack.c.l.b16 %v29
    %v351 = vunpack.c.l.b16 %v30
    %v352 = vunpack.c.l.b16 %v31
    %v353 = vunpack.c.l.b16 %v32
    %v354 = vunpack.c.l.b16 %v33
    %v355 = vunpack.c.l.b16 %v34
    %v356 = vunpack.c.l.b16 %v35
    %v357 = vunpack.c.l.b16 %v36
    %v358 = vunpack.c.l.b16 %v37
    %v359 = vunpack.c.l.b16 %v38
    %v360 = vunpack.c.l.b16 %v39
    %v361 = vunpack.c.l.b16 %v40
    %v362 = vunpack.c.l.b16 %v41
    %v363 = vunpack.c.l.b16 %v42
    %v364 = vunpack.c.l.b16 %v43
    %v365 = vunpack.c.l.b16 %v44
    %v366 = vunpack.c.l.b16 %v45
    %v367 = vunpack.c.l.b16 %v46
    %v368 = vunpack.c.l.b16 %v47
    %v369 = vunpack.c.l.b16 %v48
    %v370 = vunpack.c.l.b16 %v49
    %v371 = vunpack.c.l.b16 %v50
    %v372 = vunpack.c.l.b16 %v51
    %v373 = vunpack.c.l.b16 %v52
    %v374 = vunpack.c.l.b16 %v53
    %v375 = vunpack.c.l.b16 %v54
    %v376 = vunpack.c.l.b16 %v55
    %v377 = vunpack.c.l.b16 %v56
    %v378 = vunpack.c.l.b16 %v57
    %v379 = vunpack.c.l.b16 %v58
    %v380 = vunpack.c.l.b16 %v59
    %v381 = vunpack.c.l.b16 %v60
    %v382 = vunpack.c.l.b16 %v61
    %v383 = vunpack.c.l.b16 %v62
    %v384 = vunpack.c.l.b16 %v63
    %v385 = vunpack.c.l.b16 %v64
    %v386 = vunpack.c.l.b16 %v65
    %v387 = vunpack.c.l.b16 %v66
    %v388 = vunpack.c.l.b16 %v67
    %v389 = vunpack.c.l.b16 %v68
    %v390 = vunpack.c.l.b16 %v69
    %v391 = vunpack.c.l.b16 %v70
    %v392 = vunpack.c.l.b16 %v71
    %v393 = vunpack.c.l.b16 %v72
    %v394 = vunpack.c.l.b16 %v73
    %v395 = vunpack.c.l.b16 %v74
    %v396 = vunpack.c.l.b16 %v75
    %v397 = vunpack.c.l.b16 %v76
    %v398 = vunpack.c.l.b16 %v77
    %v399 = vunpack.c.l.b16 %v78
    %v400 = vunpack.c.l.b16 %v79
    %v401 = vunpack.c.l.b16 %v80
    %v402 = vunpack.c.l.b16 %v81
    %v403 = vunpack.c.l.b16 %v82
    %v404 = vunpack.c.l.b16 %v83
    %v405 = vunpack.c.l.b16 %v84
    %v406 = vunpack.c.l.b16 %v85
    %v407 = vunpack.c.l.b16 %v86
    %v408 = vunpack.c.l.b16 %v87
    %v409 = vunpack.c.l.b16 %v88
    %v410 = vunpack.c.l.b16 %v89
    %v411 = vunpack.c.l.b16 %v90
    %v412 = vunpack.c.l.b16 %v91
    %v413 = vunpack.c.l.b16 %v92
    %v414 = vunpack.c.l.b16 %v93
    %v415 = vunpack.c.l.b16 %v94
    %v416 = vunpack.c.l.b16 %v95
    %v417 = vunpack.c.l.b16 %v96
    %v418 = vunpack.c.l.b16 %v97
    %v419 = vunpack.c.l.b16 %v98
    %v420 = vunpack.c.l.b16 %v99
    %v421 = vunpack.c.l.b16 %v100
    %v422 = vunpack.c.l.b16 %v101
    %v423 = vunpack.c.l.b16 %v102
    %v424 = vunpack.c.l.b16 %v103
    %v425 = vunpack.c.l.b16 %v104
    %v426 = vunpack.c.l.b16 %v105
    %v427 = vunpack.c.l.b16 %v106
    %v428 = vunpack.c.l.b16 %v107
    %v429 = vunpack.c.l.b16 %v108
    %v430 = vunpack.c.l.b16 %v109
    %v431 = vunpack.c.l.b16 %v110
    %v432 = vunpack.c.l.b16 %v111
    %v433 = vunpack.c.l.b16 %v112
    %v434 = vunpack.c.l.b16 %v113
    %v435 = vunpack.c.l.b16 %v114
    %v436 = vunpack.c.l.b16 %v115
    %v437 = vunpack.c.l.b16 %v116
    %v438 = vunpack.c.l.b16 %v117
    %v439 = vunpack.c.l.b16 %v118
    %v440 = vunpack.c.l.b16 %v119
    %v441 = vunpack.c.l.b16 %v120
    %v442 = vunpack.c.l.b16 %v121
    %v443 = vunpack.c.l.b16 %v122
    %v444 = vunpack.c.l.b16 %v123
    %v445 = vunpack.c.l.b16 %v124
    %v446 = vunpack.c.l.b16 %v125
    %v447 = vunpack.c.l.b16 %v126
    %v448 = vunpack.c.l.b16 %v127
    %v449 = vunpack.c.l.b16 %v128
    %v450 = vunpack.c.l.b16 %v129
    %v451 = vunpack.c.l.b16 %v130
    %v452 = vunpack.c.l.b16 %v131
    %v453 = vunpack.c.l.b16 %v132
    %v454 = vunpack.c.l.b16 %v133
    %v455 = vunpack.c.l.b16 %v134
    %v456 = vunpack.c.l.b16 %v135
    %v457 = vunpack.c.l.b16 %v136
    %v458 = vunpack.c.l.b16 %v137
    %v459 = vunpack.c.l.b16 %v138
    %v460 = vunpack.c.l.b16 %v139
    %v461 = vunpack.c.l.b16 %v140
    %v462 = vunpack.c.l.b16 %v141
    %v463 = vunpack.c.l.b16 %v142
    %v464 = vunpack.c.l.b16 %v143
    %v465 = vunpack.c.l.b16 %v144
    %v466 = vunpack.c.l.b16 %v145
    %v467 = vunpack.c.l.b16 %v146
    %v468 = vunpack.c.l.b16 %v147
    %v469 = vunpack.c.l.b16 %v148
    %v470 = vunpack.c.l.b16 %v149
    %v471 = vunpack.c.l.b16 %v150
    %v472 = vunpack.c.l.b16 %v151
    %v473 = vunpack.c.l.b16 %v152
    %v474 = vunpack.c.l.b16 %v153
    %v475 = vunpack.c.l.b16 %v154
    %v476 = vpack.c.b16 %v349, %v348
    %v477 = vpack.c.b16 %v351, %v350
    %v478 = vpack.c.b16 %v353, %v352
    %v479 = vpack.c.b16 %v355, %v354
    %v480 = vpack.c.b16 %v357, %v356
    %v481 = vpack.c.b16 %v359, %v358
    %v482 = vpack.c.b16 %v361, %v360
    %v483 = vpack.c.b16 %v363, %v362
    %v484 = vpack.c.b16 %v365, %v364
    %v485 = vpack.c.b16 %v367, %v366
    %v486 = vpack.c.b16 %v369, %v368
    %v487 = vpack.c.b16 %v371, %v370
    %v488 = vpack.c.b16 %v373, %v372
    %v489 = vpack.c.b16 %v375, %v374
    %v490 = vpack.c.b16 %v377, %v376
    %v491 = vpack.c.b16 %v379, %v378
    %v492 = vpack.c.b16 %v381, %v380
    %v493 = vpack.c.b16 %v383, %v382
    %v494 = vpack.c.b16 %v385, %v384
    %v495 = vpack.c.b16 %v387, %v386
    %v496 = vpack.c.b16 %v389, %v388
    %v497 = vpack.c.b16 %v391, %v390
    %v498 = vpack.c.b16 %v393, %v392
    %v499 = vpack.c.b16 %v395, %v394
    %v500 = vpack.c.b16 %v397, %v396
    %v501 = vpack.c.b16 %v399, %v398
    %v502 = vpack.c.b16 %v401, %v400
    %v503 = vpack.c.b16 %v403, %v402
    %v504 = vpack.c.b16 %v405, %v404
    %v505 = vpack.c.b16 %v407, %v406
    %v506 = vpack.c.b16 %v409, %v408
    %v507 = vpack.c.b16 %v411, %v410
    %v508 = vpack.c.b16 %v413, %v412
    %v509 = vpack.c.b16 %v415, %v414
    %v510 = vpack.c.b16 %v417, %v416
    %v511 = vpack.c.b16 %v419, %v418
    %v512 = vpack.c.b16 %v421, %v420
    %v513 = vpack.c.b16 %v423, %v422
    %v514 = vpack.c.b16 %v425, %v424
    %v515 = vpack.c.b16 %v427, %v426
    %v516 = vpack.c.b16 %v429, %v428
    %v517 = vpack.c.b16 %v431, %v430
    %v518 = vpack.c.b16 %v433, %v432
    %v519 = vpack.c.b16 %v435, %v434
    %v520 = vpack.c.b16 %v437, %v436
    %v521 = vpack.c.b16 %v439, %v438
    %v522 = vpack.c.b16 %v441, %v440
    %v523 = vpack.c.b16 %v443, %v442
    %v524 = vpack.c.b16 %v445, %v444
    %v525 = vpack.c.b16 %v447, %v446
    %v526 = vpack.c.b16 %v449, %v448
    %v527 = vpack.c.b16 %v451, %v450
    %v528 = vpack.c.b16 %v453, %v452
    %v529 = vpack.c.b16 %v455, %v454
    %v530 = vpack.c.b16 %v457, %v456
    %v531 = vpack.c.b16 %v459, %v458
    %v532 = vpack.c.b16 %v461, %v460
    %v533 = vpack.c.b16 %v463, %v462
    %v534 = vpack.c.b16 %v465, %v464
    %v535 = vpack.c.b16 %v467, %v466
    %v536 = vpack.c.b16 %v469, %v468
    %v537 = vpack.c.b16 %v471, %v470
    %v538 = vpack.c.b16 %v473, %v472
    %v539 = vpack.c.b16 %v475, %v474
    %604 = vmatprep.subr.bf16.mxu0 0
    %605 = vmatpush1.bf16.msra.mxu0 %v476
    %606 = vmatprep.subr.bf16.mxu0 0
    %607 = vmatpush1.bf16.msra.mxu0 %v477
    %608 = vmatprep.subr.bf16.mxu0 0
    %609 = vmatpush1.bf16.msra.mxu0 %v478
    %610 = vmatprep.subr.bf16.mxu0 0
    %611 = vmatpush1.bf16.msra.mxu0 %v479
    %612 = vmatprep.subr.bf16.mxu0 0
    %613 = vmatpush1.bf16.msra.mxu0 %v480
    %614 = vmatprep.subr.bf16.mxu0 0
    %615 = vmatpush1.bf16.msra.mxu0 %v481
    %616 = vmatprep.subr.bf16.mxu0 0
    %617 = vmatpush1.bf16.msra.mxu0 %v482
    %618 = vmatprep.subr.bf16.mxu0 0
    %619 = vmatpush1.bf16.msra.mxu0 %v483
    %620 = vmatprep.subr.bf16.mxu0 0
    %621 = vmatpush1.bf16.msra.mxu0 %v484
    %622 = vmatprep.subr.bf16.mxu0 0
    %623 = vmatpush1.bf16.msra.mxu0 %v485
    %624 = vmatprep.subr.bf16.mxu0 0
    %625 = vmatpush1.bf16.msra.mxu0 %v486
    %626 = vmatprep.subr.bf16.mxu0 0
    %627 = vmatpush1.bf16.msra.mxu0 %v487
    %628 = vmatprep.subr.bf16.mxu0 0
    %629 = vmatpush1.bf16.msra.mxu0 %v488
    %630 = vmatprep.subr.bf16.mxu0 0
    %631 = vmatpush1.bf16.msra.mxu0 %v489
    %632 = vmatprep.subr.bf16.mxu0 0
    %633 = vmatpush1.bf16.msra.mxu0 %v490
    %634 = vmatprep.subr.bf16.mxu0 0
    %635 = vmatpush1.bf16.msra.mxu0 %v491
    %636 = vmatprep.mubr.bf16.mxu0 %v200
    %637 = vmatmul.mubr.bf16.gmra.mrb[0].mxu0 %v186
    %v638 = vpop.f32.mrb[0].mxu0
    %v639 = vadd.f32 %v160, %v638
    %v640 = vpop.f32.mrb[0].mxu0
    %v641 = vpop.f32.mrb[0].mxu0
    %v642 = vpop.f32.mrb[0].mxu0
    %643 = vdwg.mxu0
    %644 = vmatprep.subr.bf16.mxu0 0
    %645 = vmatpush1.bf16.msra.mxu0 %v492
    %646 = vmatprep.subr.bf16.mxu0 0
    %647 = vmatpush1.bf16.msra.mxu0 %v493
    %648 = vmatprep.subr.bf16.mxu0 0
    %649 = vmatpush1.bf16.msra.mxu0 %v494
    %650 = vmatprep.subr.bf16.mxu0 0
    %651 = vmatpush1.bf16.msra.mxu0 %v495
    %652 = vmatprep.subr.bf16.mxu0 0
    %653 = vmatpush1.bf16.msra.mxu0 %v496
    %654 = vmatprep.subr.bf16.mxu0 0
    %655 = vmatpush1.bf16.msra.mxu0 %v497
    %656 = vmatprep.subr.bf16.mxu0 0
    %657 = vmatpush1.bf16.msra.mxu0 %v498
    %658 = vmatprep.subr.bf16.mxu0 0
    %659 = vmatpush1.bf16.msra.mxu0 %v499
    %660 = vmatprep.subr.bf16.mxu0 0
    %661 = vmatpush1.bf16.msra.mxu0 %v500
    %662 = vmatprep.subr.bf16.mxu0 0
    %663 = vmatpush1.bf16.msra.mxu0 %v501
    %664 = vmatprep.subr.bf16.mxu0 0
    %665 = vmatpush1.bf16.msra.mxu0 %v502
    %666 = vmatprep.subr.bf16.mxu0 0
    %667 = vmatpush1.bf16.msra.mxu0 %v503
    %668 = vmatprep.subr.bf16.mxu0 0
    %669 = vmatpush1.bf16.msra.mxu0 %v504
    %670 = vmatprep.subr.bf16.mxu0 0
    %671 = vmatpush1.bf16.msra.mxu0 %v505
    %672 = vmatprep.subr.bf16.mxu0 0
    %673 = vmatpush1.bf16.msra.mxu0 %v506
    %674 = vmatprep.subr.bf16.mxu0 0
    %675 = vmatpush1.bf16.msra.mxu0 %v507
    %676 = vmatprep.mubr.bf16.mxu0 %v210
    %677 = vmatmul.mubr.bf16.gmra.mrb[0].mxu0 %v208
    %v678 = vpop.f32.mrb[0].mxu0
    %v679 = vadd.f32 %v639, %v678
    %v680 = vpop.f32.mrb[0].mxu0
    %v681 = vpop.f32.mrb[0].mxu0
    %v682 = vpop.f32.mrb[0].mxu0
    %683 = vdwg.mxu0
    %684 = vmatprep.subr.bf16.mxu0 0
    %685 = vmatpush1.bf16.msra.mxu0 %v508
    %686 = vmatprep.subr.bf16.mxu0 0
    %687 = vmatpush1.bf16.msra.mxu0 %v509
    %688 = vmatprep.subr.bf16.mxu0 0
    %689 = vmatpush1.bf16.msra.mxu0 %v510
    %690 = vmatprep.subr.bf16.mxu0 0
    %691 = vmatpush1.bf16.msra.mxu0 %v511
    %692 = vmatprep.subr.bf16.mxu0 0
    %693 = vmatpush1.bf16.msra.mxu0 %v512
    %694 = vmatprep.subr.bf16.mxu0 0
    %695 = vmatpush1.bf16.msra.mxu0 %v513
    %696 = vmatprep.subr.bf16.mxu0 0
    %697 = vmatpush1.bf16.msra.mxu0 %v514
    %698 = vmatprep.subr.bf16.mxu0 0
    %699 = vmatpush1.bf16.msra.mxu0 %v515
    %700 = vmatprep.subr.bf16.mxu0 0
    %701 = vmatpush1.bf16.msra.mxu0 %v516
    %702 = vmatprep.subr.bf16.mxu0 0
    %703 = vmatpush1.bf16.msra.mxu0 %v517
    %704 = vmatprep.subr.bf16.mxu0 0
    %705 = vmatpush1.bf16.msra.mxu0 %v518
    %706 = vmatprep.subr.bf16.mxu0 0
    %707 = vmatpush1.bf16.msra.mxu0 %v519
    %708 = vmatprep.subr.bf16.mxu0 0
    %709 = vmatpush1.bf16.msra.mxu0 %v520
    %710 = vmatprep.subr.bf16.mxu0 0
    %711 = vmatpush1.bf16.msra.mxu0 %v521
    %712 = vmatprep.subr.bf16.mxu0 0
    %713 = vmatpush1.bf16.msra.mxu0 %v522
    %714 = vmatprep.subr.bf16.mxu0 0
    %715 = vmatpush1.bf16.msra.mxu0 %v523
    %716 = vmatprep.mubr.bf16.mxu0 %v207
    %717 = vmatmul.mubr.bf16.gmra.mrb[0].mxu0 %v193
    %v718 = vpop.f32.mrb[0].mxu0
    %v719 = vadd.f32 %v679, %v718
    %v720 = vpop.f32.mrb[0].mxu0
    %v721 = vpop.f32.mrb[0].mxu0
    %v722 = vpop.f32.mrb[0].mxu0
    %723 = vdwg.mxu0
    %724 = vmatprep.subr.bf16.mxu0 0
    %725 = vmatpush1.bf16.msra.mxu0 %v524
    %726 = vmatprep.subr.bf16.mxu0 0
    %727 = vmatpush1.bf16.msra.mxu0 %v525
    %728 = vmatprep.subr.bf16.mxu0 0
    %729 = vmatpush1.bf16.msra.mxu0 %v526
    %730 = vmatprep.subr.bf16.mxu0 0
    %731 = vmatpush1.bf16.msra.mxu0 %v527
    %732 = vmatprep.subr.bf16.mxu0 0
    %733 = vmatpush1.bf16.msra.mxu0 %v528
    %734 = vmatprep.subr.bf16.mxu0 0
    %735 = vmatpush1.bf16.msra.mxu0 %v529
    %736 = vmatprep.subr.bf16.mxu0 0
    %737 = vmatpush1.bf16.msra.mxu0 %v530
    %738 = vmatprep.subr.bf16.mxu0 0
    %739 = vmatpush1.bf16.msra.mxu0 %v531
    %740 = vmatprep.subr.bf16.mxu0 0
    %741 = vmatpush1.bf16.msra.mxu0 %v532
    %742 = vmatprep.subr.bf16.mxu0 0
    %743 = vmatpush1.bf16.msra.mxu0 %v533
    %744 = vmatprep.subr.bf16.mxu0 0
    %745 = vmatpush1.bf16.msra.mxu0 %v534
    %746 = vmatprep.subr.bf16.mxu0 0
    %747 = vmatpush1.bf16.msra.mxu0 %v535
    %748 = vmatprep.subr.bf16.mxu0 0
    %749 = vmatpush1.bf16.msra.mxu0 %v536
    %750 = vmatprep.subr.bf16.mxu0 0
    %751 = vmatpush1.bf16.msra.mxu0 %v537
    %752 = vmatprep.subr.bf16.mxu0 0
    %753 = vmatpush1.bf16.msra.mxu0 %v538
    %754 = vmatprep.subr.bf16.mxu0 0
    %755 = vmatpush1.bf16.msra.mxu0 %v539
    %756 = vmatprep.mubr.bf16.mxu0 %v211
    %757 = vmatmul.mubr.bf16.gmra.mrb[0].mxu0 %v209
    %v758 = vpop.f32.mrb[0].mxu0
    %v759 = vadd.f32 %v719, %v758
    %v760 = vpop.f32.mrb[0].mxu0
    %v761 = vpop.f32.mrb[0].mxu0
    %v762 = vpop.f32.mrb[0].mxu0
    %763 = vdwg.mxu0
    %v764 = vtanh.pop %v759
    %v765 = vmul.f32 %v764, %v764
    %vm766 = vcmask 123904
    %v767 = vsel %vm766, %v765, 0.0
    %768 = vadd.xlane.f32.xlu0 %v767
    %v769 = vpop.xlane.xlu0 %768
    %v770 = vmax.f32 %v769, 1e-24
    %v771 = vrsqrt.pop %v770
    %v772 = vmul.f32 %v764, %v771
    %v773 = vld [vmem:[%s3] sm:$0xff]
    %v774 = vld [vmem:[%s3 + $0x8] sm:$0xff]
    %vm775 = vcmask 130048
    %v777 = vsel %vm775, %v772, 0
    %779 = vmatprep.subr.mxu0 0.0
    %780 = vmatpush1.msra.mxu0 %v773
    %781 = vmatprep.subr.mxu0 0.0
    %782 = vmatpush1.msra.mxu0 %v774
    %783 = vmatprep.subr.mxu0 0.0
    %784 = vmatpush1.msra.mxu0 0.0
    %785 = vmatprep.subr.mxu0 0.0
    %786 = vmatpush1.msra.mxu0 0.0
    %787 = vmatprep.subr.mxu0 0.0
    %788 = vmatpush1.msra.mxu0 0.0
    %789 = vmatprep.subr.mxu0 0.0
    %790 = vmatpush1.msra.mxu0 0.0
    %791 = vmatprep.subr.mxu0 0.0
    %792 = vmatpush1.msra.mxu0 0.0
    %793 = vmatprep.subr.mxu0 0.0
    %794 = vmatpush1.msra.mxu0 0.0
    %795 = vmatprep.subr.mxu0 0.0
    %796 = vmatpush1.msra.mxu0 0.0
    %797 = vmatprep.subr.mxu0 0.0
    %798 = vmatpush1.msra.mxu0 0.0
    %799 = vmatprep.subr.mxu0 0.0
    %800 = vmatpush1.msra.mxu0 0.0
    %801 = vmatprep.subr.mxu0 0.0
    %802 = vmatpush1.msra.mxu0 0.0
    %803 = vmatprep.subr.mxu0 0.0
    %804 = vmatpush1.msra.mxu0 0.0
    %805 = vmatprep.subr.mxu0 0.0
    %806 = vmatpush1.msra.mxu0 0.0
    %807 = vmatprep.subr.mxu0 0.0
    %808 = vmatpush1.msra.mxu0 0.0
    %809 = vmatprep.subr.mxu0 0.0
    %810 = vmatpush1.msra.mxu0 0.0
    %811 = vmatprep.subr.mxu0 0.0
    %812 = vmatpush1.msra.mxu0 0.0
    %813 = vmatprep.subr.mxu0 0.0
    %814 = vmatpush1.msra.mxu0 0.0
    %815 = vmatprep.subr.mxu0 0.0
    %816 = vmatpush1.msra.mxu0 0.0
    %817 = vmatprep.subr.mxu0 0.0
    %818 = vmatpush1.msra.mxu0 0.0
    %819 = vmatprep.subr.mxu0 0.0
    %820 = vmatpush1.msra.mxu0 0.0
    %821 = vmatprep.subr.mxu0 0.0
    %822 = vmatpush1.msra.mxu0 0.0
    %823 = vmatprep.subr.mxu0 0.0
    %824 = vmatpush1.msra.mxu0 0.0
    %825 = vmatprep.subr.mxu0 0.0
    %826 = vmatpush1.msra.mxu0 0.0
    %827 = vmatprep.subr.mxu0 0.0
    %828 = vmatpush1.msra.mxu0 0.0
    %829 = vmatprep.subr.mxu0 0.0
    %830 = vmatpush1.msra.mxu0 0.0
    %831 = vmatprep.subr.mxu0 0.0
    %832 = vmatpush1.msra.mxu0 0.0
    %833 = vmatprep.subr.mxu0 0.0
    %834 = vmatpush1.msra.mxu0 0.0
    %835 = vmatprep.subr.mxu0 0.0
    %836 = vmatpush1.msra.mxu0 0.0
    %837 = vmatprep.subr.mxu0 0.0
    %838 = vmatpush1.msra.mxu0 0.0
    %839 = vmatprep.subr.mxu0 0.0
    %840 = vmatpush1.msra.mxu0 0.0
    %841 = vmatprep.subr.mxu0 0.0
    %842 = vmatpush1.msra.mxu0 0.0
    %843 = vmatprep.mubr.f32.mxu0 0.0
    %844 = vmatmul.mubr.f32.gmra.mrb[0].mxu0 %v777
    %v845 = vpop.f32.mrb[0].mxu0
    %v846 = vadd.f32 0.0, %v845
    %v847 = vpop.f32.mrb[0].mxu0
    %848 = vdwg.mxu0
    %v849 = vmul.f32 %v846, %v846
    %v850 = vld [vmem:[%s4] sm:$0x1]
    %s851 = sld [smem:[#allocation2]]
    %v852 = vstv %s851
    %v854 = vsel %vm775, %v850, 0
    %v857 = vsel %vm775, %v849, 0
    %859 = vmatprep.subr.mxu0 0.0
    %860 = vmatpush1.xpose.msra.mxu0 %v857
    %861 = vmatprep.subr.mxu0 0.0
    %862 = vmatpush1.xpose.msra.mxu0 0.0
    %863 = vmatprep.subr.mxu0 0.0
    %864 = vmatpush1.xpose.msra.mxu0 0.0
    %865 = vmatprep.subr.mxu0 0.0
    %866 = vmatpush1.xpose.msra.mxu0 0.0
    %867 = vmatprep.subr.mxu0 0.0
    %868 = vmatpush1.xpose.msra.mxu0 0.0
    %869 = vmatprep.subr.mxu0 0.0
    %870 = vmatpush1.xpose.msra.mxu0 0.0
    %871 = vmatprep.subr.mxu0 0.0
    %872 = vmatpush1.xpose.msra.mxu0 0.0
    %873 = vmatprep.subr.mxu0 0.0
    %874 = vmatpush1.xpose.msra.mxu0 0.0
    %875 = vmatprep.subr.mxu0 0.0
    %876 = vmatpush1.xpose.msra.mxu0 0.0
    %877 = vmatprep.subr.mxu0 0.0
    %878 = vmatpush1.xpose.msra.mxu0 0.0
    %879 = vmatprep.subr.mxu0 0.0
    %880 = vmatpush1.xpose.msra.mxu0 0.0
    %881 = vmatprep.subr.mxu0 0.0
    %882 = vmatpush1.xpose.msra.mxu0 0.0
    %883 = vmatprep.subr.mxu0 0.0
    %884 = vmatpush1.xpose.msra.mxu0 0.0
    %885 = vmatprep.subr.mxu0 0.0
    %886 = vmatpush1.xpose.msra.mxu0 0.0
    %887 = vmatprep.subr.mxu0 0.0
    %888 = vmatpush1.xpose.msra.mxu0 0.0
    %889 = vmatprep.subr.mxu0 0.0
    %890 = vmatpush1.xpose.msra.mxu0 0.0
    %891 = vmatprep.subr.mxu0 0.0
    %892 = vmatpush1.xpose.msra.mxu0 0.0
    %893 = vmatprep.subr.mxu0 0.0
    %894 = vmatpush1.xpose.msra.mxu0 0.0
    %895 = vmatprep.subr.mxu0 0.0
    %896 = vmatpush1.xpose.msra.mxu0 0.0
    %897 = vmatprep.subr.mxu0 0.0
    %898 = vmatpush1.xpose.msra.mxu0 0.0
    %899 = vmatprep.subr.mxu0 0.0
    %900 = vmatpush1.xpose.msra.mxu0 0.0
    %901 = vmatprep.subr.mxu0 0.0
    %902 = vmatpush1.xpose.msra.mxu0 0.0
    %903 = vmatprep.subr.mxu0 0.0
    %904 = vmatpush1.xpose.msra.mxu0 0.0
    %905 = vmatprep.subr.mxu0 0.0
    %906 = vmatpush1.xpose.msra.mxu0 0.0
    %907 = vmatprep.subr.mxu0 0.0
    %908 = vmatpush1.xpose.msra.mxu0 0.0
    %909 = vmatprep.subr.mxu0 0.0
    %910 = vmatpush1.xpose.msra.mxu0 0.0
    %911 = vmatprep.subr.mxu0 0.0
    %912 = vmatpush1.xpose.msra.mxu0 0.0
    %913 = vmatprep.subr.mxu0 0.0
    %914 = vmatpush1.xpose.msra.mxu0 0.0
    %915 = vmatprep.subr.mxu0 0.0
    %916 = vmatpush1.xpose.msra.mxu0 0.0
    %917 = vmatprep.subr.mxu0 0.0
    %918 = vmatpush1.xpose.msra.mxu0 0.0
    %919 = vmatprep.subr.mxu0 0.0
    %920 = vmatpush1.xpose.msra.mxu0 0.0
    %921 = vmatprep.subr.mxu0 0.0
    %922 = vmatpush1.xpose.msra.mxu0 0.0
    %923 = vmatprep.mubr.f32.mxu0 0.0
    %924 = vmatmul.mubr.f32.gmra.mrb[0].mxu0 %v854
    %v925 = vpop.f32.mrb[0].mxu0
    %v926 = vadd.f32 %v852, %v925
    %v927 = vpop.f32.mrb[0].mxu0
    %928 = vdwg.mxu0
    %vm929 = vcmask 8192
    %930 = vst.msk [vmem:[#allocation3] sm:$0x1] %vm929, %v926
    // Predicated region
    $region26: #{tpu_custom_call.1} parent=1 // pred_check
      _
    $region27: #{tpu_custom_call.1} parent=1 // pred_check_branch
      %932 = sbr.rel (0) target = $region29
    $region28: #{tpu_custom_call.1} parent=1 // pred_region
      %s934 = ssub.s32 16, 16
      %935 = vsyncadd [#allocation4], %s934
      %s937 = sshll.u32 [#allocation3], 4
      %s938 = int_to_ptr.vmem [resolvable:$true] %s937
      %940 = dma.vmem_to_hbm [thread:$0]  %s938, 16, %s6, [#allocation4]
    $region29: #{tpu_custom_call.1} parent=1 // pred_fallthru
      _
    // Predicated region
    $region30: #{tpu_custom_call.1} parent=1 // pred_check
      _
    $region31: #{tpu_custom_call.1} parent=1 // pred_check_branch
      %942 = sbr.rel (0) target = $region33
    $region32: #{tpu_custom_call.1} parent=1 // pred_region
      %943 = dma.done [#allocation4], 16
    $region33: #{tpu_custom_call.1} parent=1 // pred_fallthru
      _
    %944 = vsyncpa [#allocation4], 1

</llo_original>
